<compile_context>
chip_gen: v6e
topology: v6e:2x2x1
jax: 0.10.0
libtpu: 0.0.40
codegen_flags: <defaults>
</compile_context>

<pallas_src>
import functools

import jax
import jax.numpy as jnp
from jax import lax
from jax.experimental import pallas as pl
from jax.experimental.pallas import tpu as pltpu


_MIB = 1024 * 1024
_FUSED_SLACK_BYTES = 6 * _MIB        # chunk temporaries + compiler internal scratch
_FUSED_CHUNK_TEMP_BYTES = 2 * _MIB   # target size of per-chunk f32 temporaries
_MIN_FUSED_GRID = 4                  # need >=4 grid steps for pipelining / 2 TCs (v7x)


# ---------------------------------------------------------------------------
# VMEM budgeting (generation aware).
# ---------------------------------------------------------------------------
def _vmem_capacity_bytes():
    try:
        return int(pltpu.get_tpu_info().vmem_capacity_bytes)
    except Exception:
        return 64 * _MIB             # conservative: v7x per-TensorCore physical VMEM


def _vmem_limit(need_bytes, cap_bytes):
    # Never request the full physical VMEM; leave headroom for internal scratch.
    return int(min(int(0.85 * cap_bytes), max(int(need_bytes), 32 * _MIB)))


def _chunk_plan(c, hw, chunk_override=None):
    """(chunk, n_full, rem): lane-chunking plan bounding in-kernel f32 temporaries."""
    if chunk_override is not None:
        chunk = int(chunk_override)
        assert chunk % 128 == 0, "fused chunk must be a multiple of 128 lanes"
    else:
        chunk = (_FUSED_CHUNK_TEMP_BYTES // (4 * c)) // 128 * 128
        chunk = max(128, min(chunk, 2048))
    if chunk >= hw:
        return hw, 0, hw             # single static pass, no loop
    return chunk, hw // chunk, hw % chunk


# ---------------------------------------------------------------------------
# Shared in-kernel helpers (operate on a (1, C, HW) VMEM ref).
# ---------------------------------------------------------------------------
def _pool_gate(w_ref, x_ref, ksize, chunk, n_full, rem):
    """Global-avg-pool over the lane (spatial) axis, 1-D channel conv, sigmoid.

    Returns the per-channel gate, shape (1, C, 1), f32.  The pooling is done
    in lane chunks so only chunk-sized f32 temporaries are ever live.
    """
    c = x_ref.shape[1]
    hw = x_ref.shape[2]
    pad = (ksize - 1) // 2

    def pool_body(i, acc):
        start = pl.multiple_of(i * chunk, 128)
        xc = x_ref[:, :, pl.ds(start, chunk)]
        return acc + jnp.sum(xc.astype(jnp.float32), axis=-1)

    acc = jnp.zeros((1, c), dtype=jnp.float32)
    if n_full > 0:
        acc = lax.fori_loop(0, n_full, pool_body, acc)
    if rem > 0:
        xt = x_ref[:, :, n_full * chunk:]
        acc = acc + jnp.sum(xt.astype(jnp.float32), axis=-1)
    y = acc * (1.0 / hw)                                   # (1, C) mean

    # 1-D conv over the channel axis, zero padding (k-1)//2, no bias.  Tiny:
    # C floats; the concatenate/static-slice pattern lowers cleanly.
    if pad > 0:
        zeros = jnp.zeros((1, pad), dtype=jnp.float32)
        yp = jnp.concatenate([zeros, y, zeros], axis=1)    # (1, C + 2*pad)
    else:
        yp = y
    conv = jnp.zeros_like(y)
    for j in range(ksize):                                 # unrolled at trace time
        conv = conv + w_ref[j] * yp[:, j:j + c]
    return jax.nn.sigmoid(conv)[:, :, None]                # (1, C, 1), f32


def _scale_chunks(x_ref, o_ref, gate, chunk, n_full, rem):
    """o[:, :, s] = x[:, :, s] * gate, processed in lane chunks (in-place safe)."""
    if n_full > 0:
        @pl.loop(0, n_full)
        def _(i):
            start = pl.multiple_of(i * chunk, 128)
            xc = x_ref[:, :, pl.ds(start, chunk)]
            o_ref[:, :, pl.ds(start, chunk)] = (xc * gate).astype(o_ref.dtype)
    if rem > 0:
        start = n_full * chunk
        xt = x_ref[:, :, start:]
        o_ref[:, :, start:] = (xt * gate).astype(o_ref.dtype)


# ---------------------------------------------------------------------------
# Fused single-pass kernel (double-buffered BlockSpec pipeline), 2x HBM traffic.
# One lane-dense (1, C, H*W) block (= one image) per grid step.
# ---------------------------------------------------------------------------
def _eca_fused_kernel(w_ref, x_ref, o_ref, *, ksize, chunk, n_full, rem):
    gate = _pool_gate(w_ref, x_ref, ksize, chunk, n_full, rem)
    _scale_chunks(x_ref, o_ref, gate, chunk, n_full, rem)


def _eca_fused_db_call(x3, conv_weight, *, fused_chunk=None):
    b, c, hw = x3.shape
    ksize = int(conv_weight.shape[0])
    chunk, n_full, rem = _chunk_plan(c, hw, fused_chunk)
    cap = _vmem_capacity_bytes()
    block_bytes = c * hw * x3.dtype.itemsize
    vmem_limit = _vmem_limit(4 * block_bytes + _FUSED_SLACK_BYTES, cap)
    kernel = functools.partial(_eca_fused_kernel, ksize=ksize,
                               chunk=chunk, n_full=n_full, rem=rem)
    return pl.pallas_call(
        kernel,
        out_shape=jax.ShapeDtypeStruct((b, c, hw), x3.dtype),
        grid_spec=pltpu.PrefetchScalarGridSpec(
            num_scalar_prefetch=0,
            grid=(b,),
            in_specs=[
                # Tiny conv weight: scalar reads from SMEM.
                pl.BlockSpec(memory_space=pltpu.MemorySpace.SMEM),
                # One full (C, HW) image per grid step.  Last two block dims
                # equal the array dims, so no (8, 128) divisibility issue.
                pl.BlockSpec((1, c, hw), lambda i: (i, 0, 0)),
            ],
            out_specs=pl.BlockSpec((1, c, hw), lambda i: (i, 0, 0)),
        ),
        compiler_params=pltpu.CompilerParams(
            dimension_semantics=("parallel",),
            vmem_limit_bytes=vmem_limit,
        ),
    )(conv_weight, x3)


# ---------------------------------------------------------------------------
# Fused single-buffer kernel (extended VMEM regime): manual DMA of one image
# into a single VMEM scratch, in-place scale, DMA out.  Still 2x HBM traffic;
# only one copy of the block resident (no double-buffering).
# ---------------------------------------------------------------------------
def _eca_fused_sb_kernel(w_ref, x_hbm, o_hbm, buf, sem, *, ksize, chunk, n_full, rem):
    i = pl.program_id(0)
    cp_in = pltpu.make_async_copy(x_hbm.at[i], buf.at[0], sem.at[0])
    cp_in.start()
    cp_in.wait()
    gate = _pool_gate(w_ref, buf, ksize, chunk, n_full, rem)
    _scale_chunks(buf, buf, gate, chunk, n_full, rem)      # in-place scale
    cp_out = pltpu.make_async_copy(buf.at[0], o_hbm.at[i], sem.at[1])
    cp_out.start()
    cp_out.wait()


def _eca_fused_sb_call(x3, conv_weight, *, fused_chunk=None):
    b, c, hw = x3.shape
    ksize = int(conv_weight.shape[0])
    chunk, n_full, rem = _chunk_plan(c, hw, fused_chunk)
    cap = _vmem_capacity_bytes()
    block_bytes = c * hw * x3.dtype.itemsize
    vmem_limit = _vmem_limit(block_bytes + _FUSED_SLACK_BYTES, cap)
    kernel = functools.partial(_eca_fused_sb_kernel, ksize=ksize,
                               chunk=chunk, n_full=n_full, rem=rem)
    return pl.pallas_call(
        kernel,
        out_shape=jax.ShapeDtypeStruct((b, c, hw), x3.dtype),
        grid_spec=pltpu.PrefetchScalarGridSpec(
            num_scalar_prefetch=0,
            grid=(b,),
            in_specs=[
                pl.BlockSpec(memory_space=pltpu.MemorySpace.SMEM),
                pl.BlockSpec(memory_space=pl.ANY),         # raw HBM ref
            ],
            out_specs=pl.BlockSpec(memory_space=pl.ANY),   # written via DMA
            scratch_shapes=[
                pltpu.VMEM((1, c, hw), x3.dtype),
                pltpu.SemaphoreType.DMA((2,)),
            ],
        ),
        compiler_params=pltpu.CompilerParams(
            dimension_semantics=("arbitrary",),
            vmem_limit_bytes=vmem_limit,
        ),
    )(conv_weight, x3)


# ---------------------------------------------------------------------------
# Two-pass fallback: tiny (B, C) gate in plain JAX (reads x once in XLA), then
# a freely tiled, fully parallel elementwise scale kernel (3x HBM traffic,
# deep 3-D parallel grid → pipelining + both v7x TensorCores).
# ---------------------------------------------------------------------------
def _eca_gate_host(x3, conv_weight):
    """(B, C, 1) sigmoid gate; only B*C floats of post-pool work."""
    ksize = int(conv_weight.shape[0])
    pad = (ksize - 1) // 2
    c = x3.shape[1]
    y = jnp.mean(x3, axis=-1, dtype=jnp.float32)               # (B, C)
    yp = jnp.pad(y, ((0, 0), (pad, pad)))
    conv = jnp.zeros_like(y)
    for j in range(ksize):
        conv = conv + conv_weight[j] * yp[:, j:j + c]
    return jax.nn.sigmoid(conv)[..., None]                     # (B, C, 1), f32


def _eca_scale_kernel(x_ref, g_ref, o_ref, *, tc, n_ctiles):
    # x_ref: (1, tc, ts); g_ref: (1, c_pad, 1) whole per-image gate (resident
    # across channel/spatial tiles); o_ref: (1, tc, ts).
    if n_ctiles == 1:
        g = g_ref[...]                                         # (1, c, 1)
    else:
        j = pl.program_id(1)
        start = pl.multiple_of(j * tc, tc)                     # tc multiple of 8+
        g = g_ref[:, pl.ds(start, tc), :]                      # (1, tc, 1)
    o_ref[...] = (x_ref[...] * g).astype(o_ref.dtype)


def _sublane_multiple(dtype):
    # Sublane packing granularity: 8 for 32-bit, 16 for bf16, 32 for int8/fp8.
    return max(8, 32 // jnp.dtype(dtype).itemsize)


def _pick_scale_tiles(c, hw, dtype, budget_bytes):
    """Pick (tc, ts): double-buffered in+out blocks plus f32 temps fit budget."""
    itemsize = jnp.dtype(dtype).itemsize
    sub = _sublane_multiple(dtype)
    # Per element resident: 2x in + 2x out (native dtype) + ~2x f32 temporaries.
    denom = 4 * itemsize + 8
    max_elems = max((budget_bytes - 2 * _MIB) // denom, 128 * sub)
    if c * hw <= max_elems:
        return c, hw
    # Shrink the spatial (lane) tile first, keeping it a multiple of 128.
    if c * 128 <= max_elems:
        ts = (max_elems // c) // 128 * 128
        return c, max(128, min(ts, hw))
    # Channel tiling (sublane axis) only needed for extremely large C.
    ts = hw if hw < 128 else min((hw // 128) * 128, 512)
    tc = (max_elems // ts) // sub * sub
    return max(sub, min(tc, c)), ts


def _eca_two_pass(x3, conv_weight, *, scale_tiles=None):
    b, c, hw = x3.shape
    gate = _eca_gate_host(x3, conv_weight)                     # (B, C, 1) f32
    cap = _vmem_capacity_bytes()
    budget = int(0.80 * cap)
    if scale_tiles is None:
        tc, ts = _pick_scale_tiles(c, hw, x3.dtype, budget)
    else:
        tc, ts = scale_tiles
    n_ctiles = int(pl.cdiv(c, tc))
    n_stiles = int(pl.cdiv(hw, ts))
    c_pad = n_ctiles * tc
    if c_pad != c:
        # Pad the (tiny) gate so in-kernel channel slices never go OOB.
        gate = jnp.pad(gate, ((0, 0), (0, c_pad - c), (0, 0)))
    itemsize = x3.dtype.itemsize
    need = 4 * tc * ts * itemsize + 2 * tc * ts * 4 + 2 * _MIB
    vmem_limit = _vmem_limit(need, cap)
    kernel = functools.partial(_eca_scale_kernel, tc=tc, n_ctiles=n_ctiles)
    return pl.pallas_call(
        kernel,
        out_shape=jax.ShapeDtypeStruct((b, c, hw), x3.dtype),
        grid_spec=pltpu.PrefetchScalarGridSpec(
            num_scalar_prefetch=0,
            grid=(b, n_ctiles, n_stiles),
            in_specs=[
                pl.BlockSpec((1, tc, ts), lambda i, j, s: (i, j, s)),
                # Whole per-image gate resident across channel/spatial tiles.
                pl.BlockSpec((1, c_pad, 1), lambda i, j, s: (i, 0, 0)),
            ],
            out_specs=pl.BlockSpec((1, tc, ts), lambda i, j, s: (i, j, s)),
        ),
        compiler_params=pltpu.CompilerParams(
            dimension_semantics=("parallel", "parallel", "parallel"),
            vmem_limit_bytes=vmem_limit,
        ),
    )(x3, gate)


# ---------------------------------------------------------------------------
# Public entry point.
# ---------------------------------------------------------------------------
def eca_forward(x, conv_weight, *, mode=None, fused_chunk=None, scale_tiles=None):
    """ECA forward. x: (B, C, H, W); conv_weight: (k,) (Conv1d weight squeezed).

    mode: None (auto), "fused", "fused_single_buffer", or "two_pass".
    fused_chunk / scale_tiles: optional tiling overrides (mainly for testing).
    """
    b, c, h, w = x.shape
    ksize = int(conv_weight.shape[0])
    assert ksize % 2 == 1, "ECA uses an odd kernel size (matches PyTorch 'same' padding)"
    hw = h * w

    # Lane-dense layout: collapse spatial dims so H*W sits on the 128-lane axis.
    x3 = x.reshape(b, c, hw)
    conv_weight = conv_weight.astype(jnp.float32)

    if mode is None:
        cap = _vmem_capacity_bytes()
        budget = int(0.80 * cap)
        block_bytes = c * hw * x.dtype.itemsize
        if b >= _MIN_FUSED_GRID and 4 * block_bytes + _FUSED_SLACK_BYTES <= budget:
            mode = "fused"                     # 2x traffic, double-buffered pipeline
        elif b >= _MIN_FUSED_GRID and block_bytes + _FUSED_SLACK_BYTES <= budget:
            mode = "fused_single_buffer"       # 2x traffic, one resident block
        else:
            # Small batch (shallow grid / idle v7x TC) or huge images:
            # fully parallel tiled two-pass path.
            mode = "two_pass"

    if mode == "fused":
        out3 = _eca_fused_db_call(x3, conv_weight, fused_chunk=fused_chunk)
    elif mode == "fused_single_buffer":
        out3 = _eca_fused_sb_call(x3, conv_weight, fused_chunk=fused_chunk)
    else:
        out3 = _eca_two_pass(x3, conv_weight, scale_tiles=scale_tiles)
    return out3.reshape(b, c, h, w)


def eca_reference(x, conv_weight):
    """Pure-JAX reference matching the PyTorch module."""
    ksize = conv_weight.shape[0]
    pad = (ksize - 1) // 2
    y = jnp.mean(x, axis=(2, 3))                               # (B, C)
    yp = jnp.pad(y, ((0, 0), (pad, pad)))
    conv = jnp.zeros_like(y)
    for j in range(ksize):
        conv = conv + conv_weight[j] * yp[:, j:j + y.shape[1]]
    gate = jax.nn.sigmoid(conv)
    return x * gate[:, :, None, None]


if __name__ == "__main__":
    root = jax.random.PRNGKey(0)

    def run_case(case_idx, shape, ksize, **kwargs):
        kx_, kw_ = jax.random.split(jax.random.fold_in(root, case_idx))
        x = jax.random.normal(kx_, shape, dtype=jnp.float32)
        w = jax.random.normal(kw_, (ksize,), dtype=jnp.float32) * 0.5
        out = jax.block_until_ready(eca_forward(x, w, **kwargs))
        ref = eca_reference(x, w)
        assert out.shape == x.shape
        assert jnp.allclose(out, ref, atol=1e-5, rtol=1e-5), (
            f"mismatch vs reference in case {case_idx} ({shape}, k={ksize}, {kwargs})")

    # 1) Primary shape from the module spec; auto dispatch (B < 4 -> two-pass).
    run_case(0, (2, 4, 16, 16), 3)
    # 2) Fused double-buffered path (B >= 4), single-pass (unchunked) body, k=5.
    run_case(1, (4, 8, 16, 16), 5)
    # 3) Fused double-buffered path with the chunked loop + lane tail exercised.
    run_case(2, (4, 8, 32, 32), 3, fused_chunk=384)
    # 4) Manual single-buffer fused path (extended VMEM regime), chunk loop.
    run_case(3, (4, 8, 16, 16), 3, mode="fused_single_buffer", fused_chunk=128)
    # 5) Two-pass path with channel + spatial tiling and in-kernel gate slicing.
    run_case(4, (2, 16, 16, 16), 3, mode="two_pass", scale_tiles=(8, 128))

    print("KERNEL_OK")
</pallas_src>

<mosaic_0001>
module attributes {stable_mosaic.version = 11 : i64} {
  func.func @_eca_scale_kernel(%arg0: i32, %arg1: i32, %arg2: i32, %arg3: memref<1x4x256xf32, #tpu.memory_space<vmem>>, %arg4: memref<1x4x1xf32, #tpu.memory_space<vmem>>, %arg5: memref<1x4x256xf32, #tpu.memory_space<vmem>>) attributes {dimension_semantics = [#tpu.dimension_semantics<parallel>, #tpu.dimension_semantics<parallel>, #tpu.dimension_semantics<parallel>], iteration_bounds = array<i64: 2, 1, 1>, scalar_prefetch = 0 : i64, scratch_operands = 0 : i64, tpu.core_type = #tpu.core_type<tc>, window_params = [{transform_indices = @transform_0, window_bounds = array<i64: 1, 4, 256>}, {transform_indices = @transform_1, window_bounds = array<i64: 1, 4, 1>}, {transform_indices = @transform_2, window_bounds = array<i64: 1, 4, 256>}]} {
    %c0 = arith.constant 0 : index
    %c0_0 = arith.constant 0 : index
    %c0_1 = arith.constant 0 : index
    %0 = vector.load %arg4[%c0, %c0_0, %c0_1] : memref<1x4x1xf32, #tpu.memory_space<vmem>>, vector<1x4x1xf32>
    %c0_2 = arith.constant 0 : index
    %c0_3 = arith.constant 0 : index
    %c0_4 = arith.constant 0 : index
    %1 = vector.load %arg3[%c0_2, %c0_3, %c0_4] : memref<1x4x256xf32, #tpu.memory_space<vmem>>, vector<1x4x256xf32>
    %2 = vector.broadcast %0 : vector<1x4x1xf32> to vector<1x4x256xf32>
    %3 = arith.mulf %1, %2 : vector<1x4x256xf32>
    %c0_5 = arith.constant 0 : index
    %c0_6 = arith.constant 0 : index
    %c0_7 = arith.constant 0 : index
    %4 = vector.load %arg5[%c0_5, %c0_6, %c0_7] : memref<1x4x256xf32, #tpu.memory_space<vmem>>, vector<1x4x256xf32>
    tpu.vector_store %arg5[%c0_5, %c0_6, %c0_7], %3 {strides = array<i32>} : memref<1x4x256xf32, #tpu.memory_space<vmem>>, vector<1x4x256xf32>,
    return
  }
  func.func @transform_0(%arg0: i32, %arg1: i32, %arg2: i32) -> (i32, i32, i32) {
    %c0_i32 = arith.constant 0 : i32
    return %arg0, %arg1, %arg2 : i32, i32, i32
  }
  func.func @transform_1(%arg0: i32, %arg1: i32, %arg2: i32) -> (i32, i32, i32) {
    %c0_i32 = arith.constant 0 : i32
    %c0_i32_0 = arith.constant 0 : i32
    %c0_i32_1 = arith.constant 0 : i32
    return %arg0, %c0_i32, %c0_i32_0 : i32, i32, i32
  }
  func.func @transform_2(%arg0: i32, %arg1: i32, %arg2: i32) -> (i32, i32, i32) {
    %c0_i32 = arith.constant 0 : i32
    return %arg0, %arg1, %arg2 : i32, i32, i32
  }
}

</mosaic_0001>

<llo_original>
// kernel: tpu_custom_call.1
$region0: #{tpu_custom_call.1}
  #allocation0 [shape = 'u32[]', space=smem, size = 0x4, offset = 0x4, fixed_abs, tag = 'smem constant byte address 0x4 - core index']
  #allocation1 [shape = 'u32[144,128]{1,0:T(1,128)}', space=vmem, size = 0x12000, scoped, tag = 'internal scratch']
  %s0 = inlined_call_operand.hbm [shape: f32[2,4,256], index: 0, kind: input, shape index: {}]
  %s1 = inlined_call_operand.vmem [shape: f32[2,4,1], index: 1, kind: input, shape index: {}]
  %s2 = inlined_call_operand.hbm [shape: f32[2,4,256], index: 2, kind: output, shape index: {}]
  %s3 = sld [smem:[#allocation0]]
  $region45: #{tpu_custom_call.1} parent=0
    _
  %s5 = ssub.s32 1, %s3
  %s6 = scalar_select 0, %s5, %s3
  $region1: #{tpu_custom_call.1} parent=0
    #allocation2 [shape = 'u8[8192]{0}', space=vmem, size = 0x2000, scoped, tag = 'input window, operand 0']
    #allocation3 [shape = 's32[2]{0}', space=sflag, size = 0x8, scoped, tag = 'scoped memory for tpu_custom_call.1']
    #allocation4 [shape = 's32[2]{0}', space=sflag, size = 0x8, scoped, tag = 'scoped memory for tpu_custom_call.1']
    #allocation5 [shape = 'u8[8192]{0}', space=vmem, size = 0x2000, scoped, tag = 'output window, operand 0']
    %7 = vsyncpa [#allocation3], 0
    %s8 = scalar_lea.sflag [#allocation3], 1
    %9 = vsyncpa %s8, 0
    %10 = vsyncpa [#allocation4], 0
    %s11 = scalar_lea.sflag [#allocation4], 1
    %12 = vsyncpa %s11, 0
    loop: start=0, step=1, limit=4
    $region2: #{tpu_custom_call.1} parent=1 // loop_pre_header
      _
    $region3: #{tpu_custom_call.1} parent=1 // loop_header
      %s14 = sphi 0, %s18
      %p15 = scmp.ge.s32.totalorder %s14, 4
      %s21 = sphi 0, %s40
      %s22 = sphi 0, %s36
      %s23 = sphi 0, %s32
      %s24 = sphi 0, %s21
      %s25 = sphi 0, %s22
      %s26 = sphi 0, %s23
      %s27 = sphi 0, %s24
      %s28 = sphi 0, %s25
      %s29 = sphi 0, %s26
      %s47 = sphi 0, %s49
      %s50 = sphi 0, %s47
      %s51 = sphi 0, %s50
      %s67 = sphi 0, %s51
      %s73 = sphi 0, %s75
      %s76 = sphi 0, %s73
      %s77 = sphi 0, %s76
      %s93 = sphi 0, %s77
      %s103 = sphi 0, %s105
      %s106 = sphi 0, %s103
      %s107 = sphi 0, %s106
      %s123 = sphi 0, %s107
    $region4: #{tpu_custom_call.1} parent=1 // loop_header_branch
      %17 = sbr.rel (%p15) target = $region8
    $region5: #{tpu_custom_call.1} parent=1 // loop_body
      %s19 = ssub.s32 %s14, 1
      %s20 = ssub.s32 %s14, 2
      %s30 = sadd.s32 1, %s23
      %p31 = scmp.ge.s32.totalorder %s30, 1
      %s32 = scalar_select %p31, 0, %s30
      %s33 = sadd.s32 1, %s22
      %s34 = scalar_select %p31, %s33, %s22
      %p35 = scmp.ge.s32.totalorder %s34, 1
      %s36 = scalar_select %p35, 0, %s34
      %s37 = sadd.s32 1, %s21
      %s38 = scalar_select %p35, %s37, %s21
      %p39 = scmp.ge.s32.totalorder %s38, 2
      %s40 = scalar_select %p39, 0, %s38
      %s41 = ssub.s32 %s21, %s40
      %s42 = ssub.s32 %s22, %s36
      %s43 = sor.u32 %s41, %s42
      %s44 = ssub.s32 %s23, %s32
      %s45 = sor.u32 %s43, %s44
      %p46 = scmp.eq.s32.totalorder %s45, 0
      %s48 = sadd.s32 %s47, 1
      %s49 = scalar_select %p46, %s47, %s48
      %p52 = pneg %p46
      %p53 = scmp.eq.s32.totalorder %s14, 1
      %p54 = por %p52, %p53
      %p55 = scmp.ne.s32.totalorder %s47, %s50
      %p56 = scmp.eq.s32.totalorder %s14, 0
      %p57 = por %p55, %p56
      %p58 = scmp.ne.s32.totalorder %s47, %s50
      %p59 = scmp.eq.s32.totalorder %s19, 1
      %p60 = por %p58, %p59
      %p61 = scmp.ne.s32.totalorder %s50, %s51
      %p62 = scmp.eq.s32.totalorder %s19, 0
      %p63 = por %p61, %p62
      %p64 = scmp.ne.s32.totalorder %s50, %s51
      %p65 = scmp.eq.s32.totalorder %s20, 1
      %p66 = por %p64, %p65
      %p68 = scmp.ne.s32.totalorder %s51, %s67
      %p69 = scmp.eq.s32.totalorder %s20, 0
      %p70 = por %p68, %p69
      %s71 = ssub.s32 %s21, %s40
      %p72 = scmp.eq.s32.totalorder %s71, 0
      %s74 = sadd.s32 %s73, 1
      %s75 = scalar_select %p72, %s73, %s74
      %p78 = pneg %p72
      %p79 = scmp.eq.s32.totalorder %s14, 1
      %p80 = por %p78, %p79
      %p81 = scmp.ne.s32.totalorder %s73, %s76
      %p82 = scmp.eq.s32.totalorder %s14, 0
      %p83 = por %p81, %p82
      %p84 = scmp.ne.s32.totalorder %s73, %s76
      %p85 = scmp.eq.s32.totalorder %s19, 1
      %p86 = por %p84, %p85
      %p87 = scmp.ne.s32.totalorder %s76, %s77
      %p88 = scmp.eq.s32.totalorder %s19, 0
      %p89 = por %p87, %p88
      %p90 = scmp.ne.s32.totalorder %s76, %s77
      %p91 = scmp.eq.s32.totalorder %s20, 1
      %p92 = por %p90, %p91
      %p94 = scmp.ne.s32.totalorder %s77, %s93
      %p95 = scmp.eq.s32.totalorder %s20, 0
      %p96 = por %p94, %p95
      %s97 = ssub.s32 %s21, %s40
      %s98 = ssub.s32 %s22, %s36
      %s99 = sor.u32 %s97, %s98
      %s100 = ssub.s32 %s23, %s32
      %s101 = sor.u32 %s99, %s100
      %p102 = scmp.eq.s32.totalorder %s101, 0
      %s104 = sadd.s32 %s103, 1
      %s105 = scalar_select %p102, %s103, %s104
      %p108 = pneg %p102
      %p109 = scmp.eq.s32.totalorder %s14, 1
      %p110 = por %p108, %p109
      %p111 = scmp.ne.s32.totalorder %s103, %s106
      %p112 = scmp.eq.s32.totalorder %s14, 0
      %p113 = por %p111, %p112
      %p114 = scmp.ne.s32.totalorder %s103, %s106
      %p115 = scmp.eq.s32.totalorder %s19, 1
      %p116 = por %p114, %p115
      %p117 = scmp.ne.s32.totalorder %s106, %s107
      %p118 = scmp.eq.s32.totalorder %s19, 0
      %p119 = por %p117, %p118
      %p120 = scmp.ne.s32.totalorder %s106, %s107
      %p121 = scmp.eq.s32.totalorder %s20, 1
      %p122 = por %p120, %p121
      %p124 = scmp.ne.s32.totalorder %s107, %s123
      %p125 = scmp.eq.s32.totalorder %s20, 0
      %p126 = por %p124, %p125
      %p127 = scmp.le.s32.totalorder 1, %s14
      %p128 = scmp.lt.s32.totalorder %s14, 3
      %p129 = pnand %p127, %p128
      %p130 = pneg %p129
      // Predicated region
      $region9: #{tpu_custom_call.1} parent=5 // pred_check
        _
      $region10: #{tpu_custom_call.1} parent=5 // pred_check_branch
        %132 = sbr.rel (%p129) target = $region12
      $region11: #{tpu_custom_call.1} parent=5 // pred_region
        %s133 = ssub.s32 %s14, 1
      $region12: #{tpu_custom_call.1} parent=5 // pred_fallthru
        _
      %p134 = scmp.lt.s32.totalorder %s14, 2
      // Predicated region
      $region13: #{tpu_custom_call.1} parent=5 // pred_check
        %p135 = pneg %p134
      $region14: #{tpu_custom_call.1} parent=5 // pred_check_branch
        %137 = sbr.rel (%p135) target = $region16
      $region15: #{tpu_custom_call.1} parent=5 // pred_region
        // Predicated region
        $region17: #{tpu_custom_call.1} parent=15 // pred_check
          %p138 = pneg %p57
        $region18: #{tpu_custom_call.1} parent=15 // pred_check_branch
          %140 = sbr.rel (%p138) target = $region20
        $region19: #{tpu_custom_call.1} parent=15 // pred_region
          %s141 = sand.u32 %s47, 1
          %s142 = scalar_lea.sflag [#allocation3], %s141
          %s143 = sand.u32 %s47, 1
          %s144 = smul.addr %s143, 8
          %s145 = scalar_lea.vmem [#allocation2], %s144
          %s146 = smul.u32 2, %s23
          %s148 = ssub.s32 128, 128
          %149 = vsyncadd %s142, %s148
          %s150 = smul.addr %s22, 2
          %s151 = sadd.s32 %s146, %s150
          %s152 = smul.addr %s21, 2
          %s153 = sadd.s32 %s151, %s152
          %s154 = smul.addr %s153, 64
          %s155 = scalar_lea.hbm %s0, %s154
          %s157 = sshll.u32 %s145, 4
          %s158 = int_to_ptr.vmem [resolvable:$true] %s157
          %160 = dma.hbm_to_vmem [thread:$0]  %s155, 128, %s158, %s142
        $region20: #{tpu_custom_call.1} parent=15 // pred_fallthru
          _
        // Predicated region
        $region21: #{tpu_custom_call.1} parent=15 // pred_check
          %p161 = pneg %p83
        $region22: #{tpu_custom_call.1} parent=15 // pred_check_branch
          %163 = sbr.rel (%p161) target = $region24
        $region23: #{tpu_custom_call.1} parent=15 // pred_region
          %p164 = scmp.lt.s32.totalorder %s21, 1
          %s165 = scalar_select %p164, %s21, 1
          %s166 = smul.addr %s165, 4
          %s167 = scalar_lea.vmem %s1, %s166
        $region24: #{tpu_custom_call.1} parent=15 // pred_fallthru
          _
      $region16: #{tpu_custom_call.1} parent=5 // pred_fallthru
        _
      %p168 = scmp.le.s32.totalorder 1, %s14
      %p169 = scmp.lt.s32.totalorder %s14, 3
      %p170 = pnand %p168, %p169
      %p171 = pneg %p170
      // Predicated region
      $region25: #{tpu_custom_call.1} parent=5 // pred_check
        _
      $region26: #{tpu_custom_call.1} parent=5 // pred_check_branch
        %173 = sbr.rel (%p170) target = $region28
      $region27: #{tpu_custom_call.1} parent=5 // pred_region
        %s174 = ssub.s32 %s14, 1
        %s175 = sand.u32 %s50, 1
        %s176 = scalar_lea.sflag [#allocation3], %s175
        %s177 = sand.u32 %s50, 1
        %s178 = smul.addr %s177, 8
        %s179 = scalar_lea.vmem [#allocation2], %s178
        // Predicated region
        $region29: #{tpu_custom_call.1} parent=27 // pred_check
          %p180 = pneg %p63
        $region30: #{tpu_custom_call.1} parent=27 // pred_check_branch
          %182 = sbr.rel (%p180) target = $region32
        $region31: #{tpu_custom_call.1} parent=27 // pred_region
          %183 = dma.done %s176, 128
        $region32: #{tpu_custom_call.1} parent=27 // pred_fallthru
          _
        %s184 = sand.u32 %s50, 1
        %s185 = scalar_lea.sflag [#allocation3], %s184
        %s186 = sand.u32 %s50, 1
        %s187 = smul.addr %s186, 8
        %s188 = scalar_lea.vmem [#allocation2], %s187
        %p189 = pneg %p63
        %p190 = pneg %p60
        %p191 = scmp.lt.s32.totalorder %s24, 1
        %s192 = scalar_select %p191, %s24, 1
        %s193 = smul.addr %s192, 4
        %s194 = scalar_lea.vmem %s1, %s193
        %p195 = pneg %p89
        %p196 = pneg %p86
        %p197 = pneg %p119
        %p198 = pneg %p116
        %s199 = sand.u32 %s106, 1
        %s200 = scalar_lea.sflag [#allocation4], %s199
        %s201 = sand.u32 %s106, 1
        %s202 = smul.addr %s201, 8
        %s203 = scalar_lea.vmem [#allocation5], %s202
        %s204 = smul.u32 2, %s26
        %p205 = scmp.lt.s32.totalorder %s24, 1
        %s206 = scalar_select %p205, %s24, 1
        %s207 = smul.addr %s206, 4
        %s208 = scalar_lea.vmem %s1, %s207
        %s209 = smul.u32 2, %s26
        %v210 = vld [vmem:[%s208] sm:$0xf]
        %v211 = vld [vmem:[%s179] sm:$0xff]
        %213 = vset.pattern.permute.xlu0 0
        %214 = vperm.xlu0 %213, %v210
        %v215 = vpop.permute.xlu0 %214
        %v217 = vunpack.c.l.s4 839922192
        %v218 = vunpack.c.0.s8 %v217
        %v219 = vlaneseq
        %v220 = vshrl.u32 %v219, 7
        %v221 = vsub.s32 %v218, %v220
        %v222 = vrot.slane %v215, %v221
        %v224 = vmul.f32 %v211, %v222
        %225 = vst [vmem:[%s203] sm:$0xff] %v224
        %s226 = sand.u32 %s106, 1
        %s227 = scalar_lea.sflag [#allocation4], %s226
        %s228 = sand.u32 %s106, 1
        %s229 = smul.addr %s228, 8
        %s230 = scalar_lea.vmem [#allocation5], %s229
        // Predicated region
        $region33: #{tpu_custom_call.1} parent=27 // pred_check
          %p231 = pneg %p116
        $region34: #{tpu_custom_call.1} parent=27 // pred_check_branch
          %233 = sbr.rel (%p231) target = $region36
        $region35: #{tpu_custom_call.1} parent=27 // pred_region
          %s234 = smul.u32 2, %s26
          %s236 = ssub.s32 128, 128
          %237 = vsyncadd %s227, %s236
          %s238 = smul.addr %s25, 2
          %s239 = sadd.s32 %s234, %s238
          %s240 = smul.addr %s24, 2
          %s241 = sadd.s32 %s239, %s240
          %s242 = smul.addr %s241, 64
          %s243 = scalar_lea.hbm %s2, %s242
          %s245 = sshll.u32 %s230, 4
          %s246 = int_to_ptr.vmem [resolvable:$true] %s245
          %248 = dma.vmem_to_hbm [thread:$0]  %s246, 128, %s243, %s227
        $region36: #{tpu_custom_call.1} parent=27 // pred_fallthru
          _
      $region28: #{tpu_custom_call.1} parent=5 // pred_fallthru
        _
      %p249 = scmp.le.s32.totalorder 2, %s14
      // Predicated region
      $region37: #{tpu_custom_call.1} parent=5 // pred_check
        %p250 = pneg %p249
      $region38: #{tpu_custom_call.1} parent=5 // pred_check_branch
        %252 = sbr.rel (%p250) target = $region40
      $region39: #{tpu_custom_call.1} parent=5 // pred_region
        %s253 = ssub.s32 %s14, 2
        // Predicated region
        $region41: #{tpu_custom_call.1} parent=39 // pred_check
          %p254 = pneg %p122
        $region42: #{tpu_custom_call.1} parent=39 // pred_check_branch
          %256 = sbr.rel (%p254) target = $region44
        $region43: #{tpu_custom_call.1} parent=39 // pred_region
          %s257 = sand.u32 %s107, 1
          %s258 = scalar_lea.sflag [#allocation4], %s257
          %s259 = sand.u32 %s107, 1
          %s260 = smul.addr %s259, 8
          %s261 = scalar_lea.vmem [#allocation5], %s260
          %262 = dma.done %s258, 128
        $region44: #{tpu_custom_call.1} parent=39 // pred_fallthru
          _
      $region40: #{tpu_custom_call.1} parent=5 // pred_fallthru
        _
    $region6: #{tpu_custom_call.1} parent=1 // loop_footer
      %s18 = sadd.s32 1, %s14
    $region7: #{tpu_custom_call.1} parent=1 // loop_footer_branch
      %13 = sbr.rel target = $region3
    $region8: #{tpu_custom_call.1} parent=1 // loop_exit
      _
    %263 = vsyncpa [#allocation3], 1
    %s264 = scalar_lea.sflag [#allocation3], 1
    %265 = vsyncpa %s264, 1
    %266 = vsyncpa [#allocation4], 1
    %s267 = scalar_lea.sflag [#allocation4], 1
    %268 = vsyncpa %s267, 1

</llo_original>
